<compile_context>
chip_gen: v5e
topology: v5e:2x2
jax: 0.10.0
libtpu: 0.0.40
codegen_flags: <defaults>
</compile_context>

<pallas_src>
import functools

import jax
import jax.numpy as jnp
from jax.experimental import pallas as pl
from jax.experimental.pallas import tpu as pltpu


def _round_up(x, n):
    return ((x + n - 1) // n) * n


def _cdiv(a, b):
    return (a + b - 1) // b


def _aplu_kernel(x_ref, a_ref, b_ref, o_ref, *, num_bins):
    # x_ref/o_ref: (tm, tn)   a_ref/b_ref: (num_bins, tn)
    xf = x_ref[...].astype(jnp.float32)
    a = a_ref[...].astype(jnp.float32)   # loaded once per tile (hoisted)
    b = b_ref[...].astype(jnp.float32)

    acc = jnp.maximum(xf, 0.0)
    # num_bins is small & static -> unrolled, pure-VPU mul/add on resident vregs.
    for k in range(num_bins):
        acc = acc + jnp.maximum(b[k][None, :] - xf, 0.0) * a[k][None, :]

    o_ref[...] = acc.astype(o_ref.dtype)


def aplu(x, alphas, betas, *, target_tile_bytes=2 << 20, max_tn=4096):
    """APLU forward. x: (..., dim); alphas/betas: (dim, num_bins)."""
    dim, num_bins = alphas.shape
    assert x.shape[-1] == dim, "channel axis (last) must equal dim"
    pre_shape = x.shape
    out_dtype = x.dtype

    x2d = x.reshape(-1, dim)
    m = x2d.shape[0]

    # Lane-major parameters: (num_bins, dim).
    a_t = jnp.transpose(alphas).astype(jnp.float32)
    b_t = jnp.transpose(betas).astype(jnp.float32)

    # Fold g rows into one lane-dense row when the channel axis is < 128 lanes.
    g = 128 // dim if (dim < 128 and 128 % dim == 0) else 1
    lane_dim = g * dim
    if g > 1:
        a_t = jnp.tile(a_t, (1, g))
        b_t = jnp.tile(b_t, (1, g))

    # Channel tiling for very wide lane dims (keeps tiles within v7x VMEM).
    if lane_dim % 128 == 0 and lane_dim > max_tn:
        tn = max_tn
        while lane_dim % tn != 0:
            tn -= 128
    else:
        tn = lane_dim

    itemsize = jnp.dtype(out_dtype).itemsize
    sub = 8 if itemsize >= 4 else 32 // itemsize   # sublane packing granularity
    m_fold = _cdiv(m, g)

    # Row tile: aim for ~target_tile_bytes per x tile, capped by the data size.
    tm = max(sub, (target_tile_bytes // max(1, tn * itemsize)) // sub * sub)
    tm = min(tm, _round_up(m_fold, sub))
    # Keep >= 2 row steps when there is enough data (v7x has 2 TensorCores).
    if _cdiv(m_fold, tm) == 1 and (lane_dim // tn) == 1 and m_fold > 2 * sub:
        tm = max(sub, _round_up(_cdiv(m_fold, 2), sub))

    rows = _round_up(m_fold, tm)
    m_pad = rows * g
    if m_pad != m:
        x2d = jnp.pad(x2d, ((0, m_pad - m), (0, 0)))
    x_fold = x2d.reshape(rows, lane_dim)

    grid = (rows // tm, lane_dim // tn)

    out = pl.pallas_call(
        functools.partial(_aplu_kernel, num_bins=num_bins),
        out_shape=jax.ShapeDtypeStruct((rows, lane_dim), out_dtype),
        grid_spec=pltpu.PrefetchScalarGridSpec(
            num_scalar_prefetch=0,
            grid=grid,
            in_specs=[
                pl.BlockSpec((tm, tn), lambda i, j: (i, j)),          # x tile
                pl.BlockSpec((num_bins, tn), lambda i, j: (0, j)),    # alphas^T
                pl.BlockSpec((num_bins, tn), lambda i, j: (0, j)),    # betas^T
            ],
            out_specs=pl.BlockSpec((tm, tn), lambda i, j: (i, j)),
        ),
        compiler_params=pltpu.CompilerParams(
            dimension_semantics=("parallel", "parallel")),
    )(x_fold, a_t, b_t)

    out = out.reshape(m_pad, dim)[:m]
    return out.reshape(pre_shape)


def aplu_reference(x, alphas, betas):
    """Pure-JAX reference mirroring the PyTorch forward."""
    dim, num_bins = alphas.shape
    pre_shape = x.shape
    xr = x.reshape(-1, dim, 1).astype(jnp.float32)
    pos = jnp.maximum(xr, 0.0)
    xs = jnp.maximum(-xr + betas.reshape(1, dim, num_bins), 0.0)
    neg = jnp.sum(xs * alphas.reshape(1, dim, num_bins), axis=-1, keepdims=True)
    return (pos + neg).reshape(pre_shape).astype(x.dtype)


if __name__ == "__main__":
    num_bins = 6   # module: num_bins=8 -> stores num_bins - 2 = 6 per channel

    # Case 1: dim=32 (< 128 -> lane folding), batch=2, seq=8.
    dim = 32
    k_x, k_a, k_b = jax.random.split(jax.random.PRNGKey(0), 3)
    x = jax.random.normal(k_x, (2, 8, dim), dtype=jnp.float32)
    alphas = jax.random.uniform(k_a, (dim, num_bins), jnp.float32,
                                minval=-0.5, maxval=0.5)
    betas = 0.5 * jax.random.normal(k_b, (dim, num_bins), dtype=jnp.float32)

    out = jax.block_until_ready(aplu(x, alphas, betas))
    ref = aplu_reference(x, alphas, betas)
    assert out.shape == x.shape
    assert jnp.allclose(out, ref, atol=1e-5, rtol=1e-5), "mismatch vs reference (dim=32)"

    # Case 2: dim=256 (multiple of 128, no folding), ragged row count -> padding path.
    dim2 = 256
    k_x2, k_a2, k_b2 = jax.random.split(jax.random.PRNGKey(1), 3)
    x2 = jax.random.normal(k_x2, (5, 4, dim2), dtype=jnp.float32)   # 20 rows
    alphas2 = jax.random.uniform(k_a2, (dim2, num_bins), jnp.float32,
                                 minval=-0.5, maxval=0.5)
    betas2 = 0.5 * jax.random.normal(k_b2, (dim2, num_bins), dtype=jnp.float32)

    out2 = jax.block_until_ready(aplu(x2, alphas2, betas2))
    ref2 = aplu_reference(x2, alphas2, betas2)
    assert out2.shape == x2.shape
    assert jnp.allclose(out2, ref2, atol=1e-5, rtol=1e-5), "mismatch vs reference (dim=256)"

    print("KERNEL_OK")
</pallas_src>

<mosaic_0001>
module attributes {stable_mosaic.version = 11 : i64} {
  func.func @_aplu_kernel(%arg0: i32, %arg1: i32, %arg2: memref<8x128xf32, #tpu.memory_space<vmem>>, %arg3: memref<6x128xf32, #tpu.memory_space<vmem>>, %arg4: memref<6x128xf32, #tpu.memory_space<vmem>>, %arg5: memref<8x128xf32, #tpu.memory_space<vmem>>) attributes {dimension_semantics = [#tpu.dimension_semantics<parallel>, #tpu.dimension_semantics<parallel>], iteration_bounds = array<i64: 1, 1>, scalar_prefetch = 0 : i64, scratch_operands = 0 : i64, tpu.core_type = #tpu.core_type<tc>, window_params = [{transform_indices = @transform_0, window_bounds = array<i64: 8, 128>}, {transform_indices = @transform_1, window_bounds = array<i64: 6, 128>}, {transform_indices = @transform_2, window_bounds = array<i64: 6, 128>}, {transform_indices = @transform_3, window_bounds = array<i64: 8, 128>}]} {
    %c0 = arith.constant 0 : index
    %c0_0 = arith.constant 0 : index
    %0 = vector.load %arg2[%c0, %c0_0] : memref<8x128xf32, #tpu.memory_space<vmem>>, vector<8x128xf32>
    %c0_1 = arith.constant 0 : index
    %c0_2 = arith.constant 0 : index
    %1 = vector.load %arg3[%c0_1, %c0_2] : memref<6x128xf32, #tpu.memory_space<vmem>>, vector<6x128xf32>
    %c0_3 = arith.constant 0 : index
    %c0_4 = arith.constant 0 : index
    %2 = vector.load %arg4[%c0_3, %c0_4] : memref<6x128xf32, #tpu.memory_space<vmem>>, vector<6x128xf32>
    %cst = arith.constant 0.000000e+00 : f32
    %3 = vector.broadcast %cst : f32 to vector<8x128xf32>
    %4 = arith.maximumf %0, %3 : vector<8x128xf32>
    %5 = vector.extract_strided_slice %2 {offsets = [0, 0], sizes = [1, 128], strides = [1, 1]} : vector<6x128xf32> to vector<1x128xf32>
    %6 = vector.shape_cast %5 : vector<1x128xf32> to vector<128xf32>
    %7 = vector.shape_cast %6 : vector<128xf32> to vector<1x128xf32>
    %8 = vector.broadcast %7 : vector<1x128xf32> to vector<8x128xf32>
    %9 = arith.subf %8, %0 : vector<8x128xf32>
    %cst_5 = arith.constant 0.000000e+00 : f32
    %10 = vector.broadcast %cst_5 : f32 to vector<8x128xf32>
    %11 = arith.maximumf %9, %10 : vector<8x128xf32>
    %12 = vector.extract_strided_slice %1 {offsets = [0, 0], sizes = [1, 128], strides = [1, 1]} : vector<6x128xf32> to vector<1x128xf32>
    %13 = vector.shape_cast %12 : vector<1x128xf32> to vector<128xf32>
    %14 = vector.shape_cast %13 : vector<128xf32> to vector<1x128xf32>
    %15 = vector.broadcast %14 : vector<1x128xf32> to vector<8x128xf32>
    %16 = arith.mulf %11, %15 : vector<8x128xf32>
    %17 = arith.addf %4, %16 : vector<8x128xf32>
    %18 = vector.extract_strided_slice %2 {offsets = [1, 0], sizes = [1, 128], strides = [1, 1]} : vector<6x128xf32> to vector<1x128xf32>
    %19 = vector.shape_cast %18 : vector<1x128xf32> to vector<128xf32>
    %20 = vector.shape_cast %19 : vector<128xf32> to vector<1x128xf32>
    %21 = vector.broadcast %20 : vector<1x128xf32> to vector<8x128xf32>
    %22 = arith.subf %21, %0 : vector<8x128xf32>
    %cst_6 = arith.constant 0.000000e+00 : f32
    %23 = vector.broadcast %cst_6 : f32 to vector<8x128xf32>
    %24 = arith.maximumf %22, %23 : vector<8x128xf32>
    %25 = vector.extract_strided_slice %1 {offsets = [1, 0], sizes = [1, 128], strides = [1, 1]} : vector<6x128xf32> to vector<1x128xf32>
    %26 = vector.shape_cast %25 : vector<1x128xf32> to vector<128xf32>
    %27 = vector.shape_cast %26 : vector<128xf32> to vector<1x128xf32>
    %28 = vector.broadcast %27 : vector<1x128xf32> to vector<8x128xf32>
    %29 = arith.mulf %24, %28 : vector<8x128xf32>
    %30 = arith.addf %17, %29 : vector<8x128xf32>
    %31 = vector.extract_strided_slice %2 {offsets = [2, 0], sizes = [1, 128], strides = [1, 1]} : vector<6x128xf32> to vector<1x128xf32>
    %32 = vector.shape_cast %31 : vector<1x128xf32> to vector<128xf32>
    %33 = vector.shape_cast %32 : vector<128xf32> to vector<1x128xf32>
    %34 = vector.broadcast %33 : vector<1x128xf32> to vector<8x128xf32>
    %35 = arith.subf %34, %0 : vector<8x128xf32>
    %cst_7 = arith.constant 0.000000e+00 : f32
    %36 = vector.broadcast %cst_7 : f32 to vector<8x128xf32>
    %37 = arith.maximumf %35, %36 : vector<8x128xf32>
    %38 = vector.extract_strided_slice %1 {offsets = [2, 0], sizes = [1, 128], strides = [1, 1]} : vector<6x128xf32> to vector<1x128xf32>
    %39 = vector.shape_cast %38 : vector<1x128xf32> to vector<128xf32>
    %40 = vector.shape_cast %39 : vector<128xf32> to vector<1x128xf32>
    %41 = vector.broadcast %40 : vector<1x128xf32> to vector<8x128xf32>
    %42 = arith.mulf %37, %41 : vector<8x128xf32>
    %43 = arith.addf %30, %42 : vector<8x128xf32>
    %44 = vector.extract_strided_slice %2 {offsets = [3, 0], sizes = [1, 128], strides = [1, 1]} : vector<6x128xf32> to vector<1x128xf32>
    %45 = vector.shape_cast %44 : vector<1x128xf32> to vector<128xf32>
    %46 = vector.shape_cast %45 : vector<128xf32> to vector<1x128xf32>
    %47 = vector.broadcast %46 : vector<1x128xf32> to vector<8x128xf32>
    %48 = arith.subf %47, %0 : vector<8x128xf32>
    %cst_8 = arith.constant 0.000000e+00 : f32
    %49 = vector.broadcast %cst_8 : f32 to vector<8x128xf32>
    %50 = arith.maximumf %48, %49 : vector<8x128xf32>
    %51 = vector.extract_strided_slice %1 {offsets = [3, 0], sizes = [1, 128], strides = [1, 1]} : vector<6x128xf32> to vector<1x128xf32>
    %52 = vector.shape_cast %51 : vector<1x128xf32> to vector<128xf32>
    %53 = vector.shape_cast %52 : vector<128xf32> to vector<1x128xf32>
    %54 = vector.broadcast %53 : vector<1x128xf32> to vector<8x128xf32>
    %55 = arith.mulf %50, %54 : vector<8x128xf32>
    %56 = arith.addf %43, %55 : vector<8x128xf32>
    %57 = vector.extract_strided_slice %2 {offsets = [4, 0], sizes = [1, 128], strides = [1, 1]} : vector<6x128xf32> to vector<1x128xf32>
    %58 = vector.shape_cast %57 : vector<1x128xf32> to vector<128xf32>
    %59 = vector.shape_cast %58 : vector<128xf32> to vector<1x128xf32>
    %60 = vector.broadcast %59 : vector<1x128xf32> to vector<8x128xf32>
    %61 = arith.subf %60, %0 : vector<8x128xf32>
    %cst_9 = arith.constant 0.000000e+00 : f32
    %62 = vector.broadcast %cst_9 : f32 to vector<8x128xf32>
    %63 = arith.maximumf %61, %62 : vector<8x128xf32>
    %64 = vector.extract_strided_slice %1 {offsets = [4, 0], sizes = [1, 128], strides = [1, 1]} : vector<6x128xf32> to vector<1x128xf32>
    %65 = vector.shape_cast %64 : vector<1x128xf32> to vector<128xf32>
    %66 = vector.shape_cast %65 : vector<128xf32> to vector<1x128xf32>
    %67 = vector.broadcast %66 : vector<1x128xf32> to vector<8x128xf32>
    %68 = arith.mulf %63, %67 : vector<8x128xf32>
    %69 = arith.addf %56, %68 : vector<8x128xf32>
    %70 = vector.extract_strided_slice %2 {offsets = [5, 0], sizes = [1, 128], strides = [1, 1]} : vector<6x128xf32> to vector<1x128xf32>
    %71 = vector.shape_cast %70 : vector<1x128xf32> to vector<128xf32>
    %72 = vector.shape_cast %71 : vector<128xf32> to vector<1x128xf32>
    %73 = vector.broadcast %72 : vector<1x128xf32> to vector<8x128xf32>
    %74 = arith.subf %73, %0 : vector<8x128xf32>
    %cst_10 = arith.constant 0.000000e+00 : f32
    %75 = vector.broadcast %cst_10 : f32 to vector<8x128xf32>
    %76 = arith.maximumf %74, %75 : vector<8x128xf32>
    %77 = vector.extract_strided_slice %1 {offsets = [5, 0], sizes = [1, 128], strides = [1, 1]} : vector<6x128xf32> to vector<1x128xf32>
    %78 = vector.shape_cast %77 : vector<1x128xf32> to vector<128xf32>
    %79 = vector.shape_cast %78 : vector<128xf32> to vector<1x128xf32>
    %80 = vector.broadcast %79 : vector<1x128xf32> to vector<8x128xf32>
    %81 = arith.mulf %76, %80 : vector<8x128xf32>
    %82 = arith.addf %69, %81 : vector<8x128xf32>
    %c0_11 = arith.constant 0 : index
    %c0_12 = arith.constant 0 : index
    %83 = vector.load %arg5[%c0_11, %c0_12] : memref<8x128xf32, #tpu.memory_space<vmem>>, vector<8x128xf32>
    tpu.vector_store %arg5[%c0_11, %c0_12], %82 {strides = array<i32>} : memref<8x128xf32, #tpu.memory_space<vmem>>, vector<8x128xf32>,
    return
  }
  func.func @transform_0(%arg0: i32, %arg1: i32) -> (i32, i32) {
    %c0_i32 = arith.constant 0 : i32
    return %arg0, %arg1 : i32, i32
  }
  func.func @transform_1(%arg0: i32, %arg1: i32) -> (i32, i32) {
    %c0_i32 = arith.constant 0 : i32
    %c0_i32_0 = arith.constant 0 : i32
    return %c0_i32, %arg1 : i32, i32
  }
  func.func @transform_2(%arg0: i32, %arg1: i32) -> (i32, i32) {
    %c0_i32 = arith.constant 0 : i32
    %c0_i32_0 = arith.constant 0 : i32
    return %c0_i32, %arg1 : i32, i32
  }
  func.func @transform_3(%arg0: i32, %arg1: i32) -> (i32, i32) {
    %c0_i32 = arith.constant 0 : i32
    return %arg0, %arg1 : i32, i32
  }
}

</mosaic_0001>

<llo_original>
// kernel: tpu_custom_call.1
$region0: #{tpu_custom_call.1}
  #allocation0 [shape = 'u32[]', space=smem, size = 0x4, offset = 0x4, fixed_abs, tag = 'smem constant byte address 0x4 - core index']
  #allocation1 [shape = 'u32[72,128]{1,0:T(1,128)}', space=vmem, size = 0x9000, scoped, tag = 'internal scratch']
  %s0 = inlined_call_operand.hbm [shape: f32[8,128], index: 0, kind: input, shape index: {}]
  %s1 = inlined_call_operand.hbm [shape: f32[6,128], index: 1, kind: input, shape index: {}]
  %s2 = inlined_call_operand.hbm [shape: f32[6,128], index: 2, kind: input, shape index: {}]
  %s3 = inlined_call_operand.hbm [shape: f32[8,128], index: 3, kind: output, shape index: {}]
  %s4 = sld [smem:[#allocation0]]
  $region34: #{tpu_custom_call.1} parent=0
    _
  %s6 = ssub.s32 1, %s4
  %s7 = scalar_select 0, %s6, %s4
  $region1: #{tpu_custom_call.1} parent=0
    #allocation2 [shape = 'u8[4096]{0}', space=vmem, size = 0x1000, scoped, tag = 'input window, operand 0, single buffered']
    #allocation3 [shape = 's32[1]{0}', space=sflag, size = 0x4, scoped, tag = 'scoped memory for tpu_custom_call.1']
    #allocation4 [shape = 's32[1]{0}', space=sflag, size = 0x4, scoped, tag = 'scoped memory for tpu_custom_call.1']
    #allocation5 [shape = 'u8[4096]{0}', space=vmem, size = 0x1000, scoped, tag = 'input window, operand 1, single buffered']
    #allocation6 [shape = 's32[1]{0}', space=sflag, size = 0x4, scoped, tag = 'scoped memory for tpu_custom_call.1']
    #allocation7 [shape = 'u8[4096]{0}', space=vmem, size = 0x1000, scoped, tag = 'input window, operand 2, single buffered']
    #allocation8 [shape = 'u8[4096]{0}', space=vmem, size = 0x1000, scoped, tag = 'output window, operand 0, single buffered']
    %8 = vsyncpa [#allocation3], 0
    %9 = vsyncpa [#allocation6], 0
    %10 = vsyncpa [#allocation4], 0
    // Predicated region
    $region2: #{tpu_custom_call.1} parent=1 // pred_check
      _
    $region3: #{tpu_custom_call.1} parent=1 // pred_check_branch
      %12 = sbr.rel (0) target = $region5
    $region4: #{tpu_custom_call.1} parent=1 // pred_region
      %14 = vsyncadd [#allocation3], 0
      %s16 = sshll.u32 %s0, 4
      %s17 = int_to_ptr.hbm [resolvable:$true] %s16
      %s18 = sshll.u32 [#allocation2], 4
      %s19 = int_to_ptr.vmem [resolvable:$true] %s18
      %21 = dma.hbm_to_vmem [thread:$0]  %s17, 128, %s19, [#allocation3]
    $region5: #{tpu_custom_call.1} parent=1 // pred_fallthru
      _
    // Predicated region
    $region6: #{tpu_custom_call.1} parent=1 // pred_check
      _
    $region7: #{tpu_custom_call.1} parent=1 // pred_check_branch
      %23 = sbr.rel (0) target = $region9
    $region8: #{tpu_custom_call.1} parent=1 // pred_region
      %25 = vsyncadd [#allocation6], 0
      %s27 = sshll.u32 %s1, 4
      %s28 = int_to_ptr.hbm [resolvable:$true] %s27
      %s29 = sshll.u32 [#allocation5], 4
      %s30 = int_to_ptr.vmem [resolvable:$true] %s29
      %32 = dma.hbm_to_vmem [thread:$0]  %s28, 128, %s30, [#allocation6]
    $region9: #{tpu_custom_call.1} parent=1 // pred_fallthru
      _
    // Predicated region
    $region10: #{tpu_custom_call.1} parent=1 // pred_check
      _
    $region11: #{tpu_custom_call.1} parent=1 // pred_check_branch
      %34 = sbr.rel (0) target = $region13
    $region12: #{tpu_custom_call.1} parent=1 // pred_region
      %36 = vsyncadd [#allocation6], 0
      %s38 = sshll.u32 %s2, 4
      %s39 = int_to_ptr.hbm [resolvable:$true] %s38
      %s40 = sshll.u32 [#allocation7], 4
      %s41 = int_to_ptr.vmem [resolvable:$true] %s40
      %43 = dma.hbm_to_vmem [thread:$0]  %s39, 128, %s41, [#allocation6]
    $region13: #{tpu_custom_call.1} parent=1 // pred_fallthru
      _
    // Predicated region
    $region14: #{tpu_custom_call.1} parent=1 // pred_check
      _
    $region15: #{tpu_custom_call.1} parent=1 // pred_check_branch
      %45 = sbr.rel (0) target = $region17
    $region16: #{tpu_custom_call.1} parent=1 // pred_region
      %47 = dma.done [#allocation3], 128
    $region17: #{tpu_custom_call.1} parent=1 // pred_fallthru
      _
    // Predicated region
    $region18: #{tpu_custom_call.1} parent=1 // pred_check
      _
    $region19: #{tpu_custom_call.1} parent=1 // pred_check_branch
      %49 = sbr.rel (0) target = $region21
    $region20: #{tpu_custom_call.1} parent=1 // pred_region
      %51 = dma.done [#allocation6], 128
    $region21: #{tpu_custom_call.1} parent=1 // pred_fallthru
      _
    // Predicated region
    $region22: #{tpu_custom_call.1} parent=1 // pred_check
      _
    $region23: #{tpu_custom_call.1} parent=1 // pred_check_branch
      %53 = sbr.rel (0) target = $region25
    $region24: #{tpu_custom_call.1} parent=1 // pred_region
      %55 = dma.done [#allocation6], 128
    $region25: #{tpu_custom_call.1} parent=1 // pred_fallthru
      _
    %v56 = vld [vmem:[#allocation2] sm:$0xff]
    %v57 = vld [vmem:[#allocation5] sm:$0x3f]
    %v58 = vld [vmem:[#allocation7] sm:$0x3f]
    %v59 = vmax.f32 %v56, 0.0
    %v60 = vperm.slane %v58, 0
    %v61 = vsub.f32 %v60, %v56
    %v62 = vmax.f32 %v61, 0.0
    %v63 = vperm.slane %v57, 0
    %v64 = vmul.f32 %v62, %v63
    %v65 = vadd.f32 %v59, %v64
    %v66 = vperm.slane %v58, 1
    %v67 = vsub.f32 %v66, %v56
    %v68 = vmax.f32 %v67, 0.0
    %v69 = vperm.slane %v57, 1
    %v70 = vmul.f32 %v68, %v69
    %v71 = vadd.f32 %v65, %v70
    %v72 = vperm.slane %v58, 2
    %v73 = vsub.f32 %v72, %v56
    %v74 = vmax.f32 %v73, 0.0
    %v75 = vperm.slane %v57, 2
    %v76 = vmul.f32 %v74, %v75
    %v77 = vadd.f32 %v71, %v76
    %v78 = vperm.slane %v58, 3
    %v79 = vsub.f32 %v78, %v56
    %v80 = vmax.f32 %v79, 0.0
    %v81 = vperm.slane %v57, 3
    %v82 = vmul.f32 %v80, %v81
    %v83 = vadd.f32 %v77, %v82
    %v84 = vperm.slane %v58, 4
    %v85 = vsub.f32 %v84, %v56
    %v86 = vmax.f32 %v85, 0.0
    %v87 = vperm.slane %v57, 4
    %v88 = vmul.f32 %v86, %v87
    %v89 = vadd.f32 %v83, %v88
    %v90 = vperm.slane %v58, 5
    %v91 = vsub.f32 %v90, %v56
    %v92 = vmax.f32 %v91, 0.0
    %v93 = vperm.slane %v57, 5
    %v94 = vmul.f32 %v92, %v93
    %v95 = vadd.f32 %v89, %v94
    %96 = vst [vmem:[#allocation8] sm:$0xff] %v95
    // Predicated region
    $region26: #{tpu_custom_call.1} parent=1 // pred_check
      _
    $region27: #{tpu_custom_call.1} parent=1 // pred_check_branch
      %98 = sbr.rel (0) target = $region29
    $region28: #{tpu_custom_call.1} parent=1 // pred_region
      %100 = vsyncadd [#allocation4], 0
      %s102 = sshll.u32 [#allocation8], 4
      %s103 = int_to_ptr.vmem [resolvable:$true] %s102
      %s104 = sshll.u32 %s3, 4
      %s105 = int_to_ptr.hbm [resolvable:$true] %s104
      %107 = dma.vmem_to_hbm [thread:$0]  %s103, 128, %s105, [#allocation4]
    $region29: #{tpu_custom_call.1} parent=1 // pred_fallthru
      _
    // Predicated region
    $region30: #{tpu_custom_call.1} parent=1 // pred_check
      _
    $region31: #{tpu_custom_call.1} parent=1 // pred_check_branch
      %109 = sbr.rel (0) target = $region33
    $region32: #{tpu_custom_call.1} parent=1 // pred_region
      %111 = dma.done [#allocation4], 128
    $region33: #{tpu_custom_call.1} parent=1 // pred_fallthru
      _
    %112 = vsyncpa [#allocation3], 1
    %113 = vsyncpa [#allocation6], 1
    %114 = vsyncpa [#allocation4], 1

</llo_original>
